<compile_context>
chip_gen: v7x
topology: tpu7x:2x2x1
jax: 0.10.0
libtpu: 0.0.40
codegen_flags: <defaults>
</compile_context>

<pallas_src>
import jax
import jax.numpy as jnp
from jax.experimental import pallas as pl
from jax.experimental.pallas import tpu as pltpu


def _round_up(x, m):
    return (x + m - 1) // m * m


def _domain_attention_kernel(bias_ref, w_ref, mask_ref, y_ref, xT_ref, out_ref):
    # bias_ref: (1,) f32 SMEM
    # w_ref:    (2R, D) f32 VMEM, rows [0:S)=cat, rows [R:R+S)=phi.T, rest zero
    # mask_ref: (R, 1) f32 VMEM, 1 for real source rows, 0 for padding
    # y_ref:    (R, 1) f32 VMEM, y zero-padded
    # xT_ref:   (D, TB) bf16 VMEM (streamed tile)         out_ref: (1, TB) f32
    R = mask_ref.shape[0]

    # Single fused MXU call: (2R, D) @ (D, TB) -> (2R, TB), f32 accumulation.
    logits = jnp.dot(w_ref[...], xT_ref[...], preferred_element_type=jnp.float32)
    con = logits[:R, :]          # (R, TB): cat_i . x_b   (vreg-aligned slice)
    theta_log = logits[R:, :]    # (R, TB): phi_i . x_b   (vreg-aligned slice)

    # F.normalize(p=4, dim=source): multiply each batch column by 1/max(||.||_4, 1e-12).
    # Padded rows of con are exactly zero, so they never pollute the norm.
    c2 = con * con
    sum_c4 = jnp.sum(c2 * c2, axis=0, keepdims=True)                      # (1, TB)
    inv_norm4 = jnp.minimum(jax.lax.rsqrt(jnp.sqrt(sum_c4)), 1e12)        # s^(-1/4), clamp == ref
    con = con * inv_norm4

    # Softmax over sources folded with theta:
    #   psi_i * theta_i = exp(con_i + theta_log_i) / sum_j exp(con_j)
    # |con| <= 1 after the L4 normalize, so no max-subtraction pass is needed.
    # The R-S padded rows would contribute exp(0)=1, hence the 0/1 mask (and zero-padded y).
    mask = mask_ref[...]                                                  # (R, 1)
    denom = jnp.sum(jnp.exp(con) * mask, axis=0, keepdims=True)           # (1, TB)
    # theta = exp(phi.x) is unclamped, exactly like the PyTorch reference (can overflow for
    # extreme activations).
    num = jnp.sum(y_ref[...] * jnp.exp(con + theta_log), axis=0, keepdims=True)  # (1, TB)

    s = num * pl.reciprocal(denom, approx=True) + bias_ref[0]             # (1, TB)
    out_ref[...] = jax.nn.sigmoid(s)


def domain_attention_forward(batch_x, cat, phi_stack, y, bias, *,
                             block_b=32768, stream_bf16=True):
    """batch_x:(B,D), cat:(S,D), phi_stack:(D,S), y:(S,), bias:(1,) -> [ (B,) float32 ]"""
    B, D = batch_x.shape
    S = cat.shape[0]
    x_dtype = jnp.bfloat16 if stream_bf16 else jnp.float32
    x_itemsize = jnp.dtype(x_dtype).itemsize

    # Batch tile: multiple of 128 (lane width). Keep >= 2 grid steps whenever possible so the
    # DMA pipeline overlaps and both TensorCores get work on v7x. No padding of B: the ragged
    # tail tile is handled by masked boundary DMA + masked output stores.
    Bp = _round_up(B, 128)
    tb = min(_round_up(block_b, 128), Bp)
    if Bp > 128:
        tb = min(tb, _round_up(pl.cdiv(Bp, 2), 128))
    n_blocks = pl.cdiv(B, tb)

    # x with batch on the lane axis, streamed in bf16. The transpose/cast is flagged for
    # fusion into the pallas_call operand (allow_input_fusion) so it is not a separate HBM
    # pass; producing x already as (D, B) bf16 upstream is even better.
    xT = batch_x.T.astype(x_dtype)                                        # (D, B)

    # Fused, sublane-aligned weight: rows [0:S)=cat, rows [R:R+S)=phi.T, zero elsewhere.
    # Kept in f32: it is VMEM-resident, so bf16 would save no bandwidth, only accuracy.
    R = _round_up(S, 8)
    w = jnp.zeros((2 * R, D), jnp.float32)
    w = w.at[:S].set(cat.astype(jnp.float32))
    w = w.at[R:R + S].set(phi_stack.T.astype(jnp.float32))

    mask = (jnp.arange(R) < S).astype(jnp.float32).reshape(R, 1)          # 1 for real sources
    y_col = jnp.zeros((R, 1), jnp.float32).at[:S, 0].set(y.astype(jnp.float32))
    bias_s = bias.reshape(1).astype(jnp.float32)

    # Double-buffered x + output tiles plus the small resident weights, with headroom.
    vmem_limit = int(min(max(2 * D * tb * x_itemsize + 2 * tb * 4
                             + 4 * (2 * R * D * 4) + (4 << 20), 8 << 20), 96 << 20))
    cost = pl.CostEstimate(
        flops=int(2 * (2 * R) * D * B),
        transcendentals=int((2 * R + 3) * B),
        bytes_accessed=int(B * D * x_itemsize + B * 4 + 2 * R * D * 4),
    )

    out = pl.pallas_call(
        _domain_attention_kernel,
        out_shape=jax.ShapeDtypeStruct((1, B), jnp.float32),
        grid=(n_blocks,),
        in_specs=[
            pl.BlockSpec(memory_space=pltpu.MemorySpace.SMEM),     # bias scalar
            pl.BlockSpec((2 * R, D), lambda i: (0, 0)),            # fused cat|phi, VMEM-resident
            pl.BlockSpec((R, 1), lambda i: (0, 0)),                # source mask, VMEM-resident
            pl.BlockSpec((R, 1), lambda i: (0, 0)),                # y (zero-padded), VMEM-resident
            pl.BlockSpec((D, tb), lambda i: (0, i)),               # x tile (double-buffered DMA)
        ],
        out_specs=pl.BlockSpec((1, tb), lambda i: (0, i)),         # lane-dense output block
        compiler_params=pltpu.CompilerParams(
            dimension_semantics=("parallel",),                     # shard batch axis across TCs
            allow_input_fusion=[False, False, False, False, True],  # fuse x transpose/cast in
            vmem_limit_bytes=vmem_limit,
        ),
        cost_estimate=cost,
    )(bias_s, w, mask, y_col, xT)

    return [out[0]]


def _reference_forward(batch_x, cat, phi_stack, y, bias):
    # Pure-JAX mirror of the PyTorch forward (source-major, like the torch code).
    hp = jax.lax.Precision.HIGHEST
    x = batch_x.astype(jnp.float32)
    con = jnp.dot(cat.astype(jnp.float32), x.T, precision=hp)               # (S, B)
    norm4 = jnp.sum(con ** 4, axis=0, keepdims=True) ** 0.25
    con = con / jnp.maximum(norm4, 1e-12)                                   # F.normalize p=4 dim=0
    psi = jax.nn.softmax(con, axis=0)                                       # (S, B)
    theta = jnp.exp(jnp.dot(x, phi_stack.astype(jnp.float32), precision=hp))  # (B, S)
    s = jnp.sum(y.reshape(-1, 1) * psi * theta.T, axis=0) + bias[0]
    return jax.nn.sigmoid(s)


def _xavier_uniform(key, shape):
    fan_in, fan_out = shape
    bound = (6.0 / (fan_in + fan_out)) ** 0.5
    return jax.random.uniform(key, shape, jnp.float32, -bound, bound)


if __name__ == "__main__":
    embedding_dim = 32     # D
    source_size = 3        # S  (== number of `cat` vectors == len(y))
    batch = 200            # B  (not a multiple of 128 -> exercises the ragged tail tile)

    key = jax.random.PRNGKey(0)
    k_x, k_cat, k_y, *k_phi = jax.random.split(key, 3 + source_size)

    batch_x = jax.random.normal(k_x, (batch, embedding_dim), jnp.float32)
    cat = jax.random.normal(k_cat, (source_size, embedding_dim), jnp.float32)

    # Deterministic "parameters" (module __init__ shapes): bias=[0], phi_src_i:(D,1) xavier.
    bias = jnp.zeros((1,), jnp.float32)
    phi_srcs = [_xavier_uniform(k, (embedding_dim, 1)) for k in k_phi]
    phi_stack = jnp.concatenate(phi_srcs, axis=1)                  # (D, S)

    # y: one label per source (the module receives it at construction time).
    y = jax.random.bernoulli(k_y, 0.5, (source_size,)).astype(jnp.float32)

    # jit the wrapper so the x transpose/cast can fuse into the pallas_call operand.
    fwd = jax.jit(domain_attention_forward)
    all_y_hat = fwd(batch_x, cat, phi_stack, y, bias)
    y_hat = jax.block_until_ready(all_y_hat[0])
    assert y_hat.shape == (batch,)

    # Tight check: quantize only x to bf16 (the weights stay f32 in the kernel now); remaining
    # differences are MXU accumulation order, the approx EUP reciprocal/rsqrt and exp fusion.
    def _q(a):
        return a.astype(jnp.bfloat16).astype(jnp.float32)
    ref_q = _reference_forward(_q(batch_x), cat, phi_stack, y, bias)
    assert jnp.allclose(y_hat, ref_q, atol=5e-3, rtol=5e-3), (
        float(jnp.max(jnp.abs(y_hat - ref_q))))

    # Loose check against the full-f32 reference: the only deliberate difference is the bf16
    # streaming of x.
    ref_f32 = _reference_forward(batch_x, cat, phi_stack, y, bias)
    assert jnp.allclose(y_hat, ref_f32, atol=3e-2), (
        float(jnp.max(jnp.abs(y_hat - ref_f32))))

    print("KERNEL_OK")
</pallas_src>

<mosaic_0001>
module attributes {stable_mosaic.version = 11 : i64} {
  func.func @_domain_attention_kernel(%arg0: i32, %arg1: memref<1xf32, #tpu.memory_space<smem>>, %arg2: memref<16x32xf32, #tpu.memory_space<vmem>>, %arg3: memref<8x1xf32, #tpu.memory_space<vmem>>, %arg4: memref<8x1xf32, #tpu.memory_space<vmem>>, %arg5: memref<32x128xbf16, #tpu.memory_space<vmem>>, %arg6: memref<1x128xf32, #tpu.memory_space<vmem>>) attributes {dimension_semantics = [#tpu.dimension_semantics<parallel>], iteration_bounds = array<i64: 2>, scalar_prefetch = 0 : i64, scratch_operands = 0 : i64, tpu.core_type = #tpu.core_type<tc>, window_params = [{transform_indices = @transform_0, window_bounds = array<i64: 1>}, {pipeline_mode = #tpu.pipeline_mode<synchronous>, transform_indices = @transform_1, window_bounds = array<i64: 16, 32>}, {pipeline_mode = #tpu.pipeline_mode<synchronous>, transform_indices = @transform_2, window_bounds = array<i64: 8, 1>}, {pipeline_mode = #tpu.pipeline_mode<synchronous>, transform_indices = @transform_3, window_bounds = array<i64: 8, 1>}, {transform_indices = @transform_4, window_bounds = array<i64: 32, 128>}, {transform_indices = @transform_5, window_bounds = array<i64: 1, 128>}]} {
    %c0 = arith.constant 0 : index
    %c0_0 = arith.constant 0 : index
    %0 = vector.load %arg2[%c0, %c0_0] : memref<16x32xf32, #tpu.memory_space<vmem>>, vector<16x32xf32>
    %c0_1 = arith.constant 0 : index
    %c0_2 = arith.constant 0 : index
    %1 = vector.load %arg5[%c0_1, %c0_2] : memref<32x128xbf16, #tpu.memory_space<vmem>>, vector<32x128xbf16>
    %cst = arith.constant dense<0.000000e+00> : vector<16x128xf32>
    %2 = tpu.matmul %0, %1, %cst {dimension_numbers = #tpu.dot_dimension_numbers<[1], [0], [0], [1], [0, 0, 1, 1], [], []>} : vector<16x32xf32>, vector<32x128xbf16>, vector<16x128xf32> -> vector<16x128xf32>
    %3 = vector.extract_strided_slice %2 {offsets = [0, 0], sizes = [8, 128], strides = [1, 1]} : vector<16x128xf32> to vector<8x128xf32>
    %4 = vector.extract_strided_slice %2 {offsets = [8, 0], sizes = [8, 128], strides = [1, 1]} : vector<16x128xf32> to vector<8x128xf32>
    %5 = arith.mulf %3, %3 : vector<8x128xf32>
    %6 = arith.mulf %5, %5 : vector<8x128xf32>
    %cst_3 = arith.constant dense<0.000000e+00> : vector<128xf32>
    %7 = vector.multi_reduction <add>, %6, %cst_3 [0] : vector<8x128xf32> to vector<128xf32>
    %8 = vector.shape_cast %7 : vector<128xf32> to vector<1x128xf32>
    %9 = math.sqrt %8 : vector<1x128xf32>
    %10 = math.rsqrt %9 : vector<1x128xf32>
    %cst_4 = arith.constant 9.99999995E+11 : f32
    %11 = vector.broadcast %cst_4 : f32 to vector<1x128xf32>
    %12 = arith.minimumf %10, %11 : vector<1x128xf32>
    %13 = vector.broadcast %12 : vector<1x128xf32> to vector<8x128xf32>
    %14 = arith.mulf %3, %13 : vector<8x128xf32>
    %c0_5 = arith.constant 0 : index
    %c0_6 = arith.constant 0 : index
    %15 = vector.load %arg3[%c0_5, %c0_6] : memref<8x1xf32, #tpu.memory_space<vmem>>, vector<8x1xf32>
    %16 = math.exp %14 : vector<8x128xf32>
    %17 = vector.broadcast %15 : vector<8x1xf32> to vector<8x128xf32>
    %18 = arith.mulf %16, %17 : vector<8x128xf32>
    %cst_7 = arith.constant dense<0.000000e+00> : vector<128xf32>
    %19 = vector.multi_reduction <add>, %18, %cst_7 [0] : vector<8x128xf32> to vector<128xf32>
    %20 = vector.shape_cast %19 : vector<128xf32> to vector<1x128xf32>
    %c0_8 = arith.constant 0 : index
    %c0_9 = arith.constant 0 : index
    %21 = vector.load %arg4[%c0_8, %c0_9] : memref<8x1xf32, #tpu.memory_space<vmem>>, vector<8x1xf32>
    %22 = arith.addf %14, %4 : vector<8x128xf32>
    %23 = math.exp %22 : vector<8x128xf32>
    %24 = vector.broadcast %21 : vector<8x1xf32> to vector<8x128xf32>
    %25 = arith.mulf %24, %23 : vector<8x128xf32>
    %cst_10 = arith.constant dense<0.000000e+00> : vector<128xf32>
    %26 = vector.multi_reduction <add>, %25, %cst_10 [0] : vector<8x128xf32> to vector<128xf32>
    %27 = vector.shape_cast %26 : vector<128xf32> to vector<1x128xf32>
    %28 = tpu.reciprocal %20 {approx = true} : vector<1x128xf32> -> vector<1x128xf32>
    %29 = arith.mulf %27, %28 : vector<1x128xf32>
    %c0_11 = arith.constant 0 : index
    %30 = memref.load %arg1[%c0_11] : memref<1xf32, #tpu.memory_space<smem>>
    %31 = vector.broadcast %30 : f32 to vector<1x128xf32>
    %32 = arith.addf %29, %31 : vector<1x128xf32>
    %33 = arith.negf %32 : vector<1x128xf32>
    %34 = math.exp %33 : vector<1x128xf32>
    %cst_12 = arith.constant 1.000000e+00 : f32
    %35 = vector.broadcast %cst_12 : f32 to vector<1x128xf32>
    %36 = arith.addf %35, %34 : vector<1x128xf32>
    %37 = arith.divf %35, %36 : vector<1x128xf32>
    %c0_13 = arith.constant 0 : index
    %c0_14 = arith.constant 0 : index
    %38 = vector.load %arg6[%c0_13, %c0_14] : memref<1x128xf32, #tpu.memory_space<vmem>>, vector<1x128xf32>
    tpu.vector_store %arg6[%c0_13, %c0_14], %37 {strides = array<i32>} : memref<1x128xf32, #tpu.memory_space<vmem>>, vector<1x128xf32>,
    return
  }
  func.func @transform_0(%arg0: i32) -> i32 {
    %c0_i32 = arith.constant 0 : i32
    %c0_i32_0 = arith.constant 0 : i32
    return %c0_i32 : i32
  }
  func.func @transform_1(%arg0: i32) -> (i32, i32) {
    %c0_i32 = arith.constant 0 : i32
    %c0_i32_0 = arith.constant 0 : i32
    %c0_i32_1 = arith.constant 0 : i32
    return %c0_i32, %c0_i32_0 : i32, i32
  }
  func.func @transform_2(%arg0: i32) -> (i32, i32) {
    %c0_i32 = arith.constant 0 : i32
    %c0_i32_0 = arith.constant 0 : i32
    %c0_i32_1 = arith.constant 0 : i32
    return %c0_i32, %c0_i32_0 : i32, i32
  }
  func.func @transform_3(%arg0: i32) -> (i32, i32) {
    %c0_i32 = arith.constant 0 : i32
    %c0_i32_0 = arith.constant 0 : i32
    %c0_i32_1 = arith.constant 0 : i32
    return %c0_i32, %c0_i32_0 : i32, i32
  }
  func.func @transform_4(%arg0: i32) -> (i32, i32) {
    %c0_i32 = arith.constant 0 : i32
    %c0_i32_0 = arith.constant 0 : i32
    return %c0_i32, %arg0 : i32, i32
  }
  func.func @transform_5(%arg0: i32) -> (i32, i32) {
    %c0_i32 = arith.constant 0 : i32
    %c0_i32_0 = arith.constant 0 : i32
    return %c0_i32, %arg0 : i32, i32
  }
}

</mosaic_0001>

<llo_original>
// kernel: domain_attention_forward.2
$region0: #{domain_attention_forward.2}
  #allocation0 [shape = 'u32[]', space=smem, size = 0x4, offset = 0x4, fixed_abs, tag = 'smem constant byte address 0x4 - core index']
  #allocation1 [shape = 'u32[144,128]{1,0:T(1,128)}', space=vmem, size = 0x12000, scoped, tag = 'internal scratch']
  #allocation2 [shape = 'f32[1]{0:T(128)S(6)}', space=smem, size = 0x200, scoped, tag = 'scoped memory for domain_attention_forward.2']
  %s0 = inlined_call_operand.<no memory space> [shape: f32[1], index: 0, kind: input, shape index: {}]
  %s1 = inlined_call_operand.vmem [shape: f32[16,32], index: 1, kind: input, shape index: {}]
  %s2 = inlined_call_operand.vmem [shape: f32[8,1], index: 2, kind: input, shape index: {}]
  %s3 = inlined_call_operand.vmem [shape: f32[8,1], index: 3, kind: input, shape index: {}]
  %s4 = inlined_call_operand.vmem [shape: f32[200,32], index: 4, kind: input, shape index: {}]
  %s5 = inlined_call_operand.hbm [shape: f32[1,200], index: 5, kind: output, shape index: {}]
  %s6 = sld [smem:[#allocation0]]
  $region53: #{domain_attention_forward.2} parent=0
    _
  %s8 = ssub.s32 1, %s6
  %s9 = scalar_select 0, %s8, %s6
  %10 = sst [smem:[#allocation2]] %s0
  $region1: #{domain_attention_forward.2} parent=0
    #allocation3 [shape = 'u8[1024]{0}', space=vmem, size = 0x400, scoped, tag = 'output window, operand 0']
    #allocation4 [shape = 's32[2]{0}', space=sflag, size = 0x8, scoped, tag = 'scoped memory for domain_attention_forward.2']
    %11 = vsyncpa [#allocation4], 0
    %s12 = scalar_lea.sflag [#allocation4], 1
    %13 = vsyncpa %s12, 0
    loop: start=0, step=1, limit=4
    $region2: #{domain_attention_forward.2} parent=1 // loop_pre_header
      _
    $region3: #{domain_attention_forward.2} parent=1 // loop_header
      %s15 = sphi 0, %s19
      %p16 = scmp.ge.s32.totalorder %s15, 4
      %s23 = sphi 0, %s23
      %s25 = sphi 0, %s23
      %s26 = sphi 0, %s25
      %s40 = sphi 0, %s26
      %s44 = sphi 0, %s44
      %s46 = sphi 0, %s44
      %s47 = sphi 0, %s46
      %s61 = sphi 0, %s47
      %s65 = sphi 0, %s65
      %s67 = sphi 0, %s65
      %s68 = sphi 0, %s67
      %s82 = sphi 0, %s68
      %s86 = sphi 0, %s86
      %s88 = sphi 0, %s86
      %s89 = sphi 0, %s88
      %s103 = sphi 0, %s89
      %s109 = sphi 0, %s111
      %s112 = sphi 0, %s109
      %s113 = sphi 0, %s112
      %s129 = sphi 0, %s113
      %s135 = sphi 0, %s137
      %s138 = sphi 0, %s135
      %s139 = sphi 0, %s138
      %s155 = sphi 0, %s139
    $region4: #{domain_attention_forward.2} parent=1 // loop_header_branch
      %18 = sbr.rel (%p16) target = $region8
    $region5: #{domain_attention_forward.2} parent=1 // loop_body
      %s20 = ssub.s32 %s15, 1
      %s21 = ssub.s32 %s15, 2
      %s22 = sadd.s32 %s15, 1
      %s24 = sadd.s32 %s23, 1
      %p27 = scmp.eq.s32.totalorder %s15, 1
      %p28 = scmp.ne.s32.totalorder %s23, %s25
      %p29 = scmp.eq.s32.totalorder %s15, 0
      %p30 = por %p28, %p29
      %p31 = scmp.ne.s32.totalorder %s23, %s25
      %p32 = scmp.eq.s32.totalorder %s20, 1
      %p33 = por %p31, %p32
      %p34 = scmp.ne.s32.totalorder %s25, %s26
      %p35 = scmp.eq.s32.totalorder %s20, 0
      %p36 = por %p34, %p35
      %p37 = scmp.ne.s32.totalorder %s25, %s26
      %p38 = scmp.eq.s32.totalorder %s21, 1
      %p39 = por %p37, %p38
      %p41 = scmp.ne.s32.totalorder %s26, %s40
      %p42 = scmp.eq.s32.totalorder %s21, 0
      %p43 = por %p41, %p42
      %s45 = sadd.s32 %s44, 1
      %p48 = scmp.eq.s32.totalorder %s15, 1
      %p49 = scmp.ne.s32.totalorder %s44, %s46
      %p50 = scmp.eq.s32.totalorder %s15, 0
      %p51 = por %p49, %p50
      %p52 = scmp.ne.s32.totalorder %s44, %s46
      %p53 = scmp.eq.s32.totalorder %s20, 1
      %p54 = por %p52, %p53
      %p55 = scmp.ne.s32.totalorder %s46, %s47
      %p56 = scmp.eq.s32.totalorder %s20, 0
      %p57 = por %p55, %p56
      %p58 = scmp.ne.s32.totalorder %s46, %s47
      %p59 = scmp.eq.s32.totalorder %s21, 1
      %p60 = por %p58, %p59
      %p62 = scmp.ne.s32.totalorder %s47, %s61
      %p63 = scmp.eq.s32.totalorder %s21, 0
      %p64 = por %p62, %p63
      %s66 = sadd.s32 %s65, 1
      %p69 = scmp.eq.s32.totalorder %s15, 1
      %p70 = scmp.ne.s32.totalorder %s65, %s67
      %p71 = scmp.eq.s32.totalorder %s15, 0
      %p72 = por %p70, %p71
      %p73 = scmp.ne.s32.totalorder %s65, %s67
      %p74 = scmp.eq.s32.totalorder %s20, 1
      %p75 = por %p73, %p74
      %p76 = scmp.ne.s32.totalorder %s67, %s68
      %p77 = scmp.eq.s32.totalorder %s20, 0
      %p78 = por %p76, %p77
      %p79 = scmp.ne.s32.totalorder %s67, %s68
      %p80 = scmp.eq.s32.totalorder %s21, 1
      %p81 = por %p79, %p80
      %p83 = scmp.ne.s32.totalorder %s68, %s82
      %p84 = scmp.eq.s32.totalorder %s21, 0
      %p85 = por %p83, %p84
      %s87 = sadd.s32 %s86, 1
      %p90 = scmp.eq.s32.totalorder %s15, 1
      %p91 = scmp.ne.s32.totalorder %s86, %s88
      %p92 = scmp.eq.s32.totalorder %s15, 0
      %p93 = por %p91, %p92
      %p94 = scmp.ne.s32.totalorder %s86, %s88
      %p95 = scmp.eq.s32.totalorder %s20, 1
      %p96 = por %p94, %p95
      %p97 = scmp.ne.s32.totalorder %s88, %s89
      %p98 = scmp.eq.s32.totalorder %s20, 0
      %p99 = por %p97, %p98
      %p100 = scmp.ne.s32.totalorder %s88, %s89
      %p101 = scmp.eq.s32.totalorder %s21, 1
      %p102 = por %p100, %p101
      %p104 = scmp.ne.s32.totalorder %s89, %s103
      %p105 = scmp.eq.s32.totalorder %s21, 0
      %p106 = por %p104, %p105
      %s107 = ssub.s32 %s15, %s22
      %p108 = scmp.eq.s32.totalorder %s107, 0
      %s110 = sadd.s32 %s109, 1
      %s111 = scalar_select %p108, %s109, %s110
      %p114 = pneg %p108
      %p115 = scmp.eq.s32.totalorder %s15, 1
      %p116 = por %p114, %p115
      %p117 = scmp.ne.s32.totalorder %s109, %s112
      %p118 = scmp.eq.s32.totalorder %s15, 0
      %p119 = por %p117, %p118
      %p120 = scmp.ne.s32.totalorder %s109, %s112
      %p121 = scmp.eq.s32.totalorder %s20, 1
      %p122 = por %p120, %p121
      %p123 = scmp.ne.s32.totalorder %s112, %s113
      %p124 = scmp.eq.s32.totalorder %s20, 0
      %p125 = por %p123, %p124
      %p126 = scmp.ne.s32.totalorder %s112, %s113
      %p127 = scmp.eq.s32.totalorder %s21, 1
      %p128 = por %p126, %p127
      %p130 = scmp.ne.s32.totalorder %s113, %s129
      %p131 = scmp.eq.s32.totalorder %s21, 0
      %p132 = por %p130, %p131
      %s133 = ssub.s32 %s15, %s22
      %p134 = scmp.eq.s32.totalorder %s133, 0
      %s136 = sadd.s32 %s135, 1
      %s137 = scalar_select %p134, %s135, %s136
      %p140 = pneg %p134
      %p141 = scmp.eq.s32.totalorder %s15, 1
      %p142 = por %p140, %p141
      %p143 = scmp.ne.s32.totalorder %s135, %s138
      %p144 = scmp.eq.s32.totalorder %s15, 0
      %p145 = por %p143, %p144
      %p146 = scmp.ne.s32.totalorder %s135, %s138
      %p147 = scmp.eq.s32.totalorder %s20, 1
      %p148 = por %p146, %p147
      %p149 = scmp.ne.s32.totalorder %s138, %s139
      %p150 = scmp.eq.s32.totalorder %s20, 0
      %p151 = por %p149, %p150
      %p152 = scmp.ne.s32.totalorder %s138, %s139
      %p153 = scmp.eq.s32.totalorder %s21, 1
      %p154 = por %p152, %p153
      %p156 = scmp.ne.s32.totalorder %s139, %s155
      %p157 = scmp.eq.s32.totalorder %s21, 0
      %p158 = por %p156, %p157
      %p159 = scmp.le.s32.totalorder 1, %s15
      %p160 = scmp.lt.s32.totalorder %s15, 3
      %p161 = pnand %p159, %p160
      %p162 = pneg %p161
      // Predicated region
      $region9: #{domain_attention_forward.2} parent=5 // pred_check
        _
      $region10: #{domain_attention_forward.2} parent=5 // pred_check_branch
        %164 = sbr.rel (%p161) target = $region12
      $region11: #{domain_attention_forward.2} parent=5 // pred_region
        %s165 = ssub.s32 %s15, 1
        // Predicated region
        $region13: #{domain_attention_forward.2} parent=11 // pred_check
          %p166 = pneg %p36
        $region14: #{domain_attention_forward.2} parent=11 // pred_check_branch
          %168 = sbr.rel (%p166) target = $region16
        $region15: #{domain_attention_forward.2} parent=11 // pred_region
          _
        $region16: #{domain_attention_forward.2} parent=11 // pred_fallthru
          _
        // Predicated region
        $region17: #{domain_attention_forward.2} parent=11 // pred_check
          %p169 = pneg %p57
        $region18: #{domain_attention_forward.2} parent=11 // pred_check_branch
          %171 = sbr.rel (%p169) target = $region20
        $region19: #{domain_attention_forward.2} parent=11 // pred_region
          _
        $region20: #{domain_attention_forward.2} parent=11 // pred_fallthru
          _
        // Predicated region
        $region21: #{domain_attention_forward.2} parent=11 // pred_check
          %p172 = pneg %p78
        $region22: #{domain_attention_forward.2} parent=11 // pred_check_branch
          %174 = sbr.rel (%p172) target = $region24
        $region23: #{domain_attention_forward.2} parent=11 // pred_region
          _
        $region24: #{domain_attention_forward.2} parent=11 // pred_fallthru
          _
        // Predicated region
        $region25: #{domain_attention_forward.2} parent=11 // pred_check
          %p175 = pneg %p99
        $region26: #{domain_attention_forward.2} parent=11 // pred_check_branch
          %177 = sbr.rel (%p175) target = $region28
        $region27: #{domain_attention_forward.2} parent=11 // pred_region
          _
        $region28: #{domain_attention_forward.2} parent=11 // pred_fallthru
          _
      $region12: #{domain_attention_forward.2} parent=5 // pred_fallthru
        _
      %p178 = scmp.lt.s32.totalorder %s15, 2
      // Predicated region
      $region29: #{domain_attention_forward.2} parent=5 // pred_check
        %p179 = pneg %p178
      $region30: #{domain_attention_forward.2} parent=5 // pred_check_branch
        %181 = sbr.rel (%p179) target = $region32
      $region31: #{domain_attention_forward.2} parent=5 // pred_region
        // Predicated region
        $region33: #{domain_attention_forward.2} parent=31 // pred_check
          %p182 = pneg %p119
        $region34: #{domain_attention_forward.2} parent=31 // pred_check_branch
          %184 = sbr.rel (%p182) target = $region36
        $region35: #{domain_attention_forward.2} parent=31 // pred_region
          %p185 = scmp.lt.s32.totalorder %s15, 1
          %s186 = scalar_select %p185, %s15, 1
          %s187 = smul.addr %s186, 8
          %s188 = scalar_lea.vmem %s4, %s187
        $region36: #{domain_attention_forward.2} parent=31 // pred_fallthru
          _
      $region32: #{domain_attention_forward.2} parent=5 // pred_fallthru
        _
      %p189 = scmp.le.s32.totalorder 1, %s15
      %p190 = scmp.lt.s32.totalorder %s15, 3
      %p191 = pnand %p189, %p190
      %p192 = pneg %p191
      // Predicated region
      $region37: #{domain_attention_forward.2} parent=5 // pred_check
        _
      $region38: #{domain_attention_forward.2} parent=5 // pred_check_branch
        %194 = sbr.rel (%p191) target = $region40
      $region39: #{domain_attention_forward.2} parent=5 // pred_region
        #allocation5 [shape = 'u8[8192]{0}', space=vmem, size = 0x2000, dematerialized = true, scoped, tag = 'FusionAdapter Buffer %fusion.1 = bf16[32,200]{1,0:T(8,128)(2,1)} fusion(%param_4.2), kind=kLoop, calls=%fused_computation.1.clone, metadata={op_name="jit(domain_attention_forward)/convert_element_type" stack_frame_id=8}']
        %s195 = ssub.s32 %s15, 1
        %p196 = pneg %p36
        %p197 = pneg %p33
        %p198 = pneg %p57
        %p199 = pneg %p54
        %p200 = pneg %p78
        %p201 = pneg %p75
        %p202 = pneg %p99
        %p203 = pneg %p96
        %p204 = scmp.lt.s32.totalorder %s20, 1
        %s205 = scalar_select %p204, %s20, 1
        %s206 = smul.addr %s205, 8
        %s207 = scalar_lea.vmem %s4, %s206
        %p208 = pneg %p125
        %p209 = pneg %p122
        %p210 = pneg %p151
        %p211 = pneg %p148
        %s212 = sand.u32 %s138, 1
        %s213 = scalar_lea.sflag [#allocation4], %s212
        %s214 = sand.u32 %s138, 1
        %s215 = scalar_lea.vmem [#allocation3], %s214
        %p216 = scmp.lt.s32.totalorder %s20, 1
        %s217 = scalar_select %p216, %s20, 1
        %s218 = smul.addr %s217, 8
        %s219 = scalar_lea.vmem %s4, %s218
        %v220 = vld [vmem:[%s219] sm:$0xff]
        %221 = xla_tuple %v220
        %222 = xla_tuple %221
        %223 = xla_tuple %v220
        %v224 = vpack.c.bf16 0.0, %v220
        %226 = vst [vmem:[#allocation5] sm:$0xf] %v224
        %s227 = scalar_lea.vmem %s219, 16
        %v228 = vld [vmem:[%s227] sm:$0xff]
        %229 = xla_tuple %v228
        %230 = xla_tuple %229
        %231 = xla_tuple %v228
        %s232 = scalar_lea.vmem [#allocation5], 4
        %v233 = vpack.c.bf16 0.0, %v228
        %235 = vst [vmem:[%s232] sm:$0xf] %v233
        %s236 = scalar_lea.vmem %s219, 32
        %v237 = vld [vmem:[%s236] sm:$0xff]
        %238 = xla_tuple %v237
        %239 = xla_tuple %238
        %240 = xla_tuple %v237
        %s241 = scalar_lea.vmem [#allocation5], 8
        %v242 = vpack.c.bf16 0.0, %v237
        %244 = vst [vmem:[%s241] sm:$0xf] %v242
        %s245 = scalar_lea.vmem %s219, 48
        %v246 = vld [vmem:[%s245] sm:$0xff]
        %247 = xla_tuple %v246
        %248 = xla_tuple %247
        %249 = xla_tuple %v246
        %s250 = scalar_lea.vmem [#allocation5], 12
        %v251 = vpack.c.bf16 0.0, %v246
        %253 = vst [vmem:[%s250] sm:$0xf] %v251
        %v255 = vld [vmem:[%s1] sm:$0xff]
        %v256 = vld [vmem:[%s1 + $0x8] sm:$0xff]
        %v257 = vld [vmem:[#allocation5] sm:$0xf]
        %v258 = vld [vmem:[#allocation5 + $0x4] sm:$0xf]
        %v259 = vld [vmem:[#allocation5 + $0x8] sm:$0xf]
        %v260 = vld [vmem:[#allocation5 + $0xc] sm:$0xf]
        %v265 = vunpack.c.l.b16 %v257
        %v266 = vunpack.c.l.b16 %v258
        %v267 = vunpack.c.l.b16 %v259
        %v268 = vunpack.c.l.b16 %v260
        %v269 = vpack.c.b16 %v266, %v265
        %v270 = vpack.c.b16 %v268, %v267
        %vm273 = vcmask 261120
        %v275 = vsel %vm273, %v255, 0
        %v278 = vsel %vm273, %v256, 0
        %280 = vmatprep.subr.bf16.mxu0 0
        %281 = vmatpush1.bf16.msra.mxu0 %v269
        %282 = vmatprep.subr.bf16.mxu0 0
        %283 = vmatpush1.bf16.msra.mxu0 %v270
        %284 = vmatprep.subr.bf16.mxu0 0
        %285 = vmatpush1.bf16.msra.mxu0 0
        %286 = vmatprep.subr.bf16.mxu0 0
        %287 = vmatpush1.bf16.msra.mxu0 0
        %288 = vmatprep.subr.bf16.mxu0 0
        %289 = vmatpush1.bf16.msra.mxu0 0
        %290 = vmatprep.subr.bf16.mxu0 0
        %291 = vmatpush1.bf16.msra.mxu0 0
        %292 = vmatprep.subr.bf16.mxu0 0
        %293 = vmatpush1.bf16.msra.mxu0 0
        %294 = vmatprep.subr.bf16.mxu0 0
        %295 = vmatpush1.bf16.msra.mxu0 0
        %296 = vmatprep.subr.bf16.mxu0 0
        %297 = vmatpush1.bf16.msra.mxu0 0
        %298 = vmatprep.subr.bf16.mxu0 0
        %299 = vmatpush1.bf16.msra.mxu0 0
        %300 = vmatprep.subr.bf16.mxu0 0
        %301 = vmatpush1.bf16.msra.mxu0 0
        %302 = vmatprep.subr.bf16.mxu0 0
        %303 = vmatpush1.bf16.msra.mxu0 0
        %304 = vmatprep.subr.bf16.mxu0 0
        %305 = vmatpush1.bf16.msra.mxu0 0
        %306 = vmatprep.subr.bf16.mxu0 0
        %307 = vmatpush1.bf16.msra.mxu0 0
        %308 = vmatprep.subr.bf16.mxu0 0
        %309 = vmatpush1.bf16.msra.mxu0 0
        %310 = vmatprep.subr.bf16.mxu0 0
        %311 = vmatpush1.bf16.msra.mxu0 0
        %312 = vmatprep.mubr.f32.mxu0 0.0
        %313 = vmatmul.mubr.f32.gmra.mrb[0].mxu0 %v275
        %v314 = vpop.f32.mrb[0].mxu0
        %v315 = vadd.f32 0.0, %v314
        %v316 = vpop.f32.mrb[0].mxu0
        %317 = vmatprep.mubr.f32.mxu0 0.0
        %318 = vmatmul.mubr.f32.gmra.mrb[0].mxu0 %v278
        %v319 = vpop.f32.mrb[0].mxu0
        %v320 = vadd.f32 0.0, %v319
        %v321 = vpop.f32.mrb[0].mxu0
        %322 = vdwg.mxu0
        %v323 = vmul.f32 %v315, %v315
        %v324 = vmul.f32 %v323, %v323
        %v325 = vrot.slane %v324, 4
        %v326 = vadd.f32 %v324, %v325
        %v327 = vrot.slane %v326, 2
        %v328 = vadd.f32 %v326, %v327
        %v329 = vrot.slane %v328, 1
        %v330 = vadd.f32 %v328, %v329
        %v331 = vrsqrt.pop %v330
        %v332 = vmul.f32 %v330, %v331
        %vm333 = vcmp.eq.f32.partialorder %v330, inf
        %v334 = vsel %vm333, %v330, %v332
        %vm335 = vcmp.eq.f32.partialorder %v330, 0.0
        %v336 = vand.u32 %v330, 2147483648
        %v337 = vsel %vm335, %v336, %v334
        %v338 = vrsqrt.pop %v337
        %v339 = vmin.f32 %v338, 1e+12
        %v340 = vmul.f32 %v315, %v339
        %v341 = vld [vmem:[%s2] sm:$0xff]
        %v342 = vmul.f32 %v340, 1.442695
        %v343 = vpow.pop %v342
        %345 = vset.pattern.permute.xlu0 0
        %346 = vperm.xlu0 %345, %v341
        %v347 = vpop.permute.xlu0 %346
        %v349 = vmul.f32 %v343, %v347
        %v350 = vrot.slane %v349, 4
        %v351 = vadd.f32 %v349, %v350
        %v352 = vrot.slane %v351, 2
        %v353 = vadd.f32 %v351, %v352
        %v354 = vrot.slane %v353, 1
        %v355 = vadd.f32 %v353, %v354
        %v356 = vld [vmem:[%s3] sm:$0xff]
        %v357 = vadd.f32 %v340, %v320
        %v358 = vmul.f32 %v357, 1.442695
        %v359 = vpow.pop %v358
        %361 = vset.pattern.permute.xlu0 0
        %362 = vperm.xlu0 %361, %v356
        %v363 = vpop.permute.xlu0 %362
        %v365 = vmul.f32 %v363, %v359
        %v366 = vrot.slane %v365, 4
        %v367 = vadd.f32 %v365, %v366
        %v368 = vrot.slane %v367, 2
        %v369 = vadd.f32 %v367, %v368
        %v370 = vrot.slane %v369, 1
        %v371 = vadd.f32 %v369, %v370
        %v372 = vrcp.pop %v355
        %v373 = vmul.f32 %v371, %v372
        %s374 = sld [smem:[#allocation2]]
        %v375 = vstv %s374
        %v376 = vadd.f32 %v373, %v375
        %v377 = vxor.u32 %v376, 2147483648
        %v378 = vmul.f32 %v377, 1.442695
        %v379 = vpow.pop %v378
        %v380 = vadd.f32 %v379, 1.0
        %v381 = vrcp.pop %v380
        %v382 = vmul.f32 1.0, %v381
        %383 = vst [vmem:[%s215] sm:$0x1] %v382
        %s384 = sand.u32 %s138, 1
        %s385 = scalar_lea.sflag [#allocation4], %s384
        %s386 = sand.u32 %s138, 1
        %s387 = scalar_lea.vmem [#allocation3], %s386
        // Predicated region
        $region41: #{domain_attention_forward.2} parent=39 // pred_check
          %p388 = pneg %p148
        $region42: #{domain_attention_forward.2} parent=39 // pred_check_branch
          %390 = sbr.rel (%p388) target = $region44
        $region43: #{domain_attention_forward.2} parent=39 // pred_region
          %s392 = ssub.s32 16, 16
          %393 = vsyncadd %s385, %s392
          %s394 = smul.addr %s20, 16
          %s395 = scalar_lea.hbm %s5, %s394
          %s397 = sshll.u32 %s387, 4
          %s398 = int_to_ptr.vmem [resolvable:$true] %s397
          %400 = dma.vmem_to_hbm [thread:$0]  %s398, 16, %s395, %s385
        $region44: #{domain_attention_forward.2} parent=39 // pred_fallthru
          _
      $region40: #{domain_attention_forward.2} parent=5 // pred_fallthru
        _
      %p401 = scmp.le.s32.totalorder 2, %s15
      // Predicated region
      $region45: #{domain_attention_forward.2} parent=5 // pred_check
        %p402 = pneg %p401
      $region46: #{domain_attention_forward.2} parent=5 // pred_check_branch
        %404 = sbr.rel (%p402) target = $region48
      $region47: #{domain_attention_forward.2} parent=5 // pred_region
        %s405 = ssub.s32 %s15, 2
        // Predicated region
        $region49: #{domain_attention_forward.2} parent=47 // pred_check
          %p406 = pneg %p154
        $region50: #{domain_attention_forward.2} parent=47 // pred_check_branch
          %408 = sbr.rel (%p406) target = $region52
        $region51: #{domain_attention_forward.2} parent=47 // pred_region
          %s409 = sand.u32 %s139, 1
          %s410 = scalar_lea.sflag [#allocation4], %s409
          %s411 = sand.u32 %s139, 1
          %s412 = scalar_lea.vmem [#allocation3], %s411
          %413 = dma.done %s410, 16
        $region52: #{domain_attention_forward.2} parent=47 // pred_fallthru
          _
      $region48: #{domain_attention_forward.2} parent=5 // pred_fallthru
        _
    $region6: #{domain_attention_forward.2} parent=1 // loop_footer
      %s19 = sadd.s32 1, %s15
    $region7: #{domain_attention_forward.2} parent=1 // loop_footer_branch
      %14 = sbr.rel target = $region3
    $region8: #{domain_attention_forward.2} parent=1 // loop_exit
      _
    %414 = vsyncpa [#allocation4], 1
    %s415 = scalar_lea.sflag [#allocation4], 1
    %416 = vsyncpa %s415, 1

</llo_original>
